<compile_context>
chip_gen: v7x
topology: tpu7x:2x2x1
jax: 0.10.0
libtpu: 0.0.40
codegen_flags: <defaults>
</compile_context>

<pallas_src>
import functools

import jax
import jax.numpy as jnp
from jax.experimental import pallas as pl
from jax.experimental.pallas import tpu as pltpu


def _instnorm_kernel(x_ref, g_ref, b_ref, o_ref, *, eps):
    # x_ref: (R_BLK, D) rows of one instance each; g/b: (R_BLK, 1) per-row affine.
    x = x_ref[...].astype(jnp.float32)
    d = x.shape[1]                      # static block width = H*W
    inv_d = 1.0 / d                     # compile-time constants: multiplies, not divides
    inv_dm1 = 1.0 / (d - 1)             # unbiased variance (torch.var default)

    mean = jnp.sum(x, axis=1, keepdims=True) * inv_d          # (R, 1)
    diff = x - mean
    var = jnp.sum(diff * diff, axis=1, keepdims=True) * inv_dm1
    inv = jax.lax.rsqrt(var + eps)                             # EUP rsqrt
    y = diff * inv * g_ref[...] + b_ref[...]
    o_ref[...] = y.astype(o_ref.dtype)


def instance_norm_2d(x, gamma, beta, eps=1e-5):
    """x: (N, C, H, W). gamma/beta: (1, C, 1, 1) per-channel affine params."""
    N, C, H, W = x.shape
    D = H * W
    rows = N * C

    x2 = x.reshape(rows, D)
    g = jnp.asarray(gamma, jnp.float32).reshape(C)
    b = jnp.asarray(beta, jnp.float32).reshape(C)
    # One affine value per (n, c) row: row r = n*C + c -> channel r % C.
    g_rows = jnp.tile(g, N).reshape(rows, 1)
    b_rows = jnp.tile(b, N).reshape(rows, 1)

    # Sublane-dense row batching: 8 rows/block for f32, 16 for bf16.
    r_blk = 16 if x.dtype == jnp.bfloat16 else 8
    num_blocks = pl.cdiv(rows, r_blk)
    rows_pad = num_blocks * r_blk
    if rows_pad != rows:
        pad = rows_pad - rows
        x2 = jnp.pad(x2, ((0, pad), (0, 0)))
        g_rows = jnp.pad(g_rows, ((0, pad), (0, 0)), constant_values=1.0)
        b_rows = jnp.pad(b_rows, ((0, pad), (0, 0)))

    # NOTE: for very large H*W (multi-MB rows) the feature axis should be
    # chunked (two-pass stats-then-normalize) to bound vreg pressure; for
    # typical InstanceNorm spatial sizes a full (r_blk, D) block fits easily.
    out = pl.pallas_call(
        functools.partial(_instnorm_kernel, eps=eps),
        out_shape=jax.ShapeDtypeStruct((rows_pad, D), x.dtype),
        grid=(num_blocks,),
        in_specs=[
            pl.BlockSpec((r_blk, D), lambda i: (i, 0)),   # 8/16 instances per step
            pl.BlockSpec((r_blk, 1), lambda i: (i, 0)),   # per-row gamma
            pl.BlockSpec((r_blk, 1), lambda i: (i, 0)),   # per-row beta
        ],
        out_specs=pl.BlockSpec((r_blk, D), lambda i: (i, 0)),
        compiler_params=pltpu.CompilerParams(
            dimension_semantics=("parallel",),   # megacore-shardable on v7x
            vmem_limit_bytes=64 << 20,
        ),
    )(x2, g_rows, b_rows)

    return out[:rows].reshape(N, C, H, W)


if __name__ == "__main__":
    key = jax.random.PRNGKey(0)
    kx, kg, kb = jax.random.split(key, 3)

    N, C, H, W = 2, 4, 16, 16
    x = jax.random.normal(kx, (N, C, H, W), dtype=jnp.float32)
    # Non-trivial per-channel affine to exercise the gamma/beta broadcast path
    # (module init is ones/zeros; semantics are identical).
    gamma = 1.0 + 0.1 * jax.random.normal(kg, (1, C, 1, 1), dtype=jnp.float32)
    beta = 0.1 * jax.random.normal(kb, (1, C, 1, 1), dtype=jnp.float32)

    y = instance_norm_2d(x, gamma, beta)
    jax.block_until_ready(y)

    # Plain-JAX reference matching the PyTorch forward:
    # per-(n,c) stats over (H, W), unbiased variance (torch.var default).
    mean = jnp.mean(x, axis=(2, 3), keepdims=True)
    var = jnp.var(x, axis=(2, 3), keepdims=True, ddof=1)
    y_ref = (x - mean) / jnp.sqrt(var + 1e-5) * gamma + beta
    assert jnp.max(jnp.abs(y - y_ref)) < 1e-4

    print("KERNEL_OK")
</pallas_src>

<mosaic_0001>
module attributes {stable_mosaic.version = 11 : i64} {
  func.func @_instnorm_kernel(%arg0: i32, %arg1: memref<8x256xf32, #tpu.memory_space<vmem>>, %arg2: memref<8x1xf32, #tpu.memory_space<vmem>>, %arg3: memref<8x1xf32, #tpu.memory_space<vmem>>, %arg4: memref<8x256xf32, #tpu.memory_space<vmem>>) attributes {dimension_semantics = [#tpu.dimension_semantics<parallel>], iteration_bounds = array<i64: 1>, scalar_prefetch = 0 : i64, scratch_operands = 0 : i64, tpu.core_type = #tpu.core_type<tc>, window_params = [{transform_indices = @transform_0, window_bounds = array<i64: 8, 256>}, {transform_indices = @transform_1, window_bounds = array<i64: 8, 1>}, {transform_indices = @transform_2, window_bounds = array<i64: 8, 1>}, {transform_indices = @transform_3, window_bounds = array<i64: 8, 256>}]} {
    %c0 = arith.constant 0 : index
    %c0_0 = arith.constant 0 : index
    %0 = vector.load %arg1[%c0, %c0_0] : memref<8x256xf32, #tpu.memory_space<vmem>>, vector<8x256xf32>
    %cst = arith.constant dense<0.000000e+00> : vector<8xf32>
    %1 = vector.multi_reduction <add>, %0, %cst [1] : vector<8x256xf32> to vector<8xf32>
    %2 = vector.shape_cast %1 : vector<8xf32> to vector<8x1xf32>
    %cst_1 = arith.constant 3.906250e-03 : f32
    %3 = vector.broadcast %cst_1 : f32 to vector<8x1xf32>
    %4 = arith.mulf %2, %3 : vector<8x1xf32>
    %5 = vector.broadcast %4 : vector<8x1xf32> to vector<8x256xf32>
    %6 = arith.subf %0, %5 : vector<8x256xf32>
    %7 = arith.mulf %6, %6 : vector<8x256xf32>
    %cst_2 = arith.constant dense<0.000000e+00> : vector<8xf32>
    %8 = vector.multi_reduction <add>, %7, %cst_2 [1] : vector<8x256xf32> to vector<8xf32>
    %9 = vector.shape_cast %8 : vector<8xf32> to vector<8x1xf32>
    %cst_3 = arith.constant 0.00392156886 : f32
    %10 = vector.broadcast %cst_3 : f32 to vector<8x1xf32>
    %11 = arith.mulf %9, %10 : vector<8x1xf32>
    %cst_4 = arith.constant 9.99999974E-6 : f32
    %12 = vector.broadcast %cst_4 : f32 to vector<8x1xf32>
    %13 = arith.addf %11, %12 : vector<8x1xf32>
    %14 = math.rsqrt %13 : vector<8x1xf32>
    %15 = vector.broadcast %14 : vector<8x1xf32> to vector<8x256xf32>
    %16 = arith.mulf %6, %15 : vector<8x256xf32>
    %c0_5 = arith.constant 0 : index
    %c0_6 = arith.constant 0 : index
    %17 = vector.load %arg2[%c0_5, %c0_6] : memref<8x1xf32, #tpu.memory_space<vmem>>, vector<8x1xf32>
    %18 = vector.broadcast %17 : vector<8x1xf32> to vector<8x256xf32>
    %19 = arith.mulf %16, %18 : vector<8x256xf32>
    %c0_7 = arith.constant 0 : index
    %c0_8 = arith.constant 0 : index
    %20 = vector.load %arg3[%c0_7, %c0_8] : memref<8x1xf32, #tpu.memory_space<vmem>>, vector<8x1xf32>
    %21 = vector.broadcast %20 : vector<8x1xf32> to vector<8x256xf32>
    %22 = arith.addf %19, %21 : vector<8x256xf32>
    %c0_9 = arith.constant 0 : index
    %c0_10 = arith.constant 0 : index
    %23 = vector.load %arg4[%c0_9, %c0_10] : memref<8x256xf32, #tpu.memory_space<vmem>>, vector<8x256xf32>
    tpu.vector_store %arg4[%c0_9, %c0_10], %22 {strides = array<i32>} : memref<8x256xf32, #tpu.memory_space<vmem>>, vector<8x256xf32>,
    return
  }
  func.func @transform_0(%arg0: i32) -> (i32, i32) {
    %c0_i32 = arith.constant 0 : i32
    %c0_i32_0 = arith.constant 0 : i32
    return %arg0, %c0_i32 : i32, i32
  }
  func.func @transform_1(%arg0: i32) -> (i32, i32) {
    %c0_i32 = arith.constant 0 : i32
    %c0_i32_0 = arith.constant 0 : i32
    return %arg0, %c0_i32 : i32, i32
  }
  func.func @transform_2(%arg0: i32) -> (i32, i32) {
    %c0_i32 = arith.constant 0 : i32
    %c0_i32_0 = arith.constant 0 : i32
    return %arg0, %c0_i32 : i32, i32
  }
  func.func @transform_3(%arg0: i32) -> (i32, i32) {
    %c0_i32 = arith.constant 0 : i32
    %c0_i32_0 = arith.constant 0 : i32
    return %arg0, %c0_i32 : i32, i32
  }
}

</mosaic_0001>

<llo_original>
// kernel: tpu_custom_call.1
$region0: #{tpu_custom_call.1}
  #allocation0 [shape = 'u32[]', space=smem, size = 0x4, offset = 0x4, fixed_abs, tag = 'smem constant byte address 0x4 - core index']
  #allocation1 [shape = 'u32[144,128]{1,0:T(1,128)}', space=vmem, size = 0x12000, scoped, tag = 'internal scratch']
  %s0 = inlined_call_operand.hbm [shape: f32[8,256], index: 0, kind: input, shape index: {}]
  %s1 = inlined_call_operand.hbm [shape: f32[8,1], index: 1, kind: input, shape index: {}]
  %s2 = inlined_call_operand.hbm [shape: f32[8,1], index: 2, kind: input, shape index: {}]
  %s3 = inlined_call_operand.hbm [shape: f32[8,256], index: 3, kind: output, shape index: {}]
  %s4 = sld [smem:[#allocation0]]
  $region34: #{tpu_custom_call.1} parent=0
    _
  %s6 = ssub.s32 1, %s4
  %s7 = scalar_select 0, %s6, %s4
  $region1: #{tpu_custom_call.1} parent=0
    #allocation2 [shape = 'u8[8192]{0}', space=vmem, size = 0x2000, scoped, tag = 'input window, operand 0, single buffered']
    #allocation3 [shape = 's32[1]{0}', space=sflag, size = 0x4, scoped, tag = 'scoped memory for tpu_custom_call.1']
    #allocation4 [shape = 's32[1]{0}', space=sflag, size = 0x4, scoped, tag = 'scoped memory for tpu_custom_call.1']
    #allocation5 [shape = 'u8[4096]{0}', space=vmem, size = 0x1000, scoped, tag = 'input window, operand 1, single buffered']
    #allocation6 [shape = 's32[1]{0}', space=sflag, size = 0x4, scoped, tag = 'scoped memory for tpu_custom_call.1']
    #allocation7 [shape = 'u8[4096]{0}', space=vmem, size = 0x1000, scoped, tag = 'input window, operand 2, single buffered']
    #allocation8 [shape = 'u8[8192]{0}', space=vmem, size = 0x2000, scoped, tag = 'output window, operand 0, single buffered']
    %8 = vsyncpa [#allocation3], 0
    %9 = vsyncpa [#allocation6], 0
    %10 = vsyncpa [#allocation4], 0
    // Predicated region
    $region2: #{tpu_custom_call.1} parent=1 // pred_check
      _
    $region3: #{tpu_custom_call.1} parent=1 // pred_check_branch
      %12 = sbr.rel (0) target = $region5
    $region4: #{tpu_custom_call.1} parent=1 // pred_region
      %s14 = ssub.s32 256, 256
      %15 = vsyncadd [#allocation3], %s14
      %s17 = sshll.u32 [#allocation2], 4
      %s18 = int_to_ptr.vmem [resolvable:$true] %s17
      %20 = dma.hbm_to_vmem [thread:$0]  %s0, 256, %s18, [#allocation3]
    $region5: #{tpu_custom_call.1} parent=1 // pred_fallthru
      _
    // Predicated region
    $region6: #{tpu_custom_call.1} parent=1 // pred_check
      _
    $region7: #{tpu_custom_call.1} parent=1 // pred_check_branch
      %22 = sbr.rel (0) target = $region9
    $region8: #{tpu_custom_call.1} parent=1 // pred_region
      %s24 = ssub.s32 128, 128
      %25 = vsyncadd [#allocation6], %s24
      %s27 = sshll.u32 [#allocation5], 4
      %s28 = int_to_ptr.vmem [resolvable:$true] %s27
      %30 = dma.hbm_to_vmem [thread:$0]  %s1, 128, %s28, [#allocation6]
    $region9: #{tpu_custom_call.1} parent=1 // pred_fallthru
      _
    // Predicated region
    $region10: #{tpu_custom_call.1} parent=1 // pred_check
      _
    $region11: #{tpu_custom_call.1} parent=1 // pred_check_branch
      %32 = sbr.rel (0) target = $region13
    $region12: #{tpu_custom_call.1} parent=1 // pred_region
      %s34 = ssub.s32 128, 128
      %35 = vsyncadd [#allocation6], %s34
      %s37 = sshll.u32 [#allocation7], 4
      %s38 = int_to_ptr.vmem [resolvable:$true] %s37
      %40 = dma.hbm_to_vmem [thread:$0]  %s2, 128, %s38, [#allocation6]
    $region13: #{tpu_custom_call.1} parent=1 // pred_fallthru
      _
    // Predicated region
    $region14: #{tpu_custom_call.1} parent=1 // pred_check
      _
    $region15: #{tpu_custom_call.1} parent=1 // pred_check_branch
      %42 = sbr.rel (0) target = $region17
    $region16: #{tpu_custom_call.1} parent=1 // pred_region
      %43 = dma.done [#allocation3], 256
    $region17: #{tpu_custom_call.1} parent=1 // pred_fallthru
      _
    // Predicated region
    $region18: #{tpu_custom_call.1} parent=1 // pred_check
      _
    $region19: #{tpu_custom_call.1} parent=1 // pred_check_branch
      %45 = sbr.rel (0) target = $region21
    $region20: #{tpu_custom_call.1} parent=1 // pred_region
      %46 = dma.done [#allocation6], 128
    $region21: #{tpu_custom_call.1} parent=1 // pred_fallthru
      _
    // Predicated region
    $region22: #{tpu_custom_call.1} parent=1 // pred_check
      _
    $region23: #{tpu_custom_call.1} parent=1 // pred_check_branch
      %48 = sbr.rel (0) target = $region25
    $region24: #{tpu_custom_call.1} parent=1 // pred_region
      %49 = dma.done [#allocation6], 128
    $region25: #{tpu_custom_call.1} parent=1 // pred_fallthru
      _
    %v50 = vld [vmem:[#allocation2] sm:$0xff]
    %v51 = vld [vmem:[#allocation2 + $0x8] sm:$0xff]
    %v52 = vadd.f32 %v50, %v51
    %53 = vadd.xlane.f32.xlu0 %v52
    %v54 = vpop.xlane.xlu0 %53
    %v55 = vmul.f32 %v54, 0.00390625
    %v56 = vsub.f32 %v50, %v55
    %v57 = vsub.f32 %v51, %v55
    %v58 = vmul.f32 %v56, %v56
    %v59 = vmul.f32 %v57, %v57
    %v60 = vadd.f32 %v58, %v59
    %61 = vadd.xlane.f32.xlu0 %v60
    %v62 = vpop.xlane.xlu0 %61
    %v63 = vmul.f32 %v62, 0.003921569
    %v64 = vadd.f32 %v63, 1e-05
    %v65 = vrsqrt.pop %v64
    %v66 = vmul.f32 %v56, %v65
    %v67 = vmul.f32 %v57, %v65
    %v68 = vld [vmem:[#allocation5] sm:$0xff]
    %70 = vset.pattern.permute.xlu0 0
    %71 = vperm.xlu0 %70, %v68
    %v72 = vpop.permute.xlu0 %71
    %v74 = vmul.f32 %v66, %v72
    %v75 = vmul.f32 %v67, %v72
    %v76 = vld [vmem:[#allocation7] sm:$0xff]
    %78 = vset.pattern.permute.xlu0 0
    %79 = vperm.xlu0 %78, %v76
    %v80 = vpop.permute.xlu0 %79
    %v82 = vadd.f32 %v74, %v80
    %v83 = vadd.f32 %v75, %v80
    %84 = vst [vmem:[#allocation8] sm:$0xff] %v82
    %85 = vst [vmem:[#allocation8 + $0x8] sm:$0xff] %v83
    // Predicated region
    $region26: #{tpu_custom_call.1} parent=1 // pred_check
      _
    $region27: #{tpu_custom_call.1} parent=1 // pred_check_branch
      %87 = sbr.rel (0) target = $region29
    $region28: #{tpu_custom_call.1} parent=1 // pred_region
      %s89 = ssub.s32 256, 256
      %90 = vsyncadd [#allocation4], %s89
      %s92 = sshll.u32 [#allocation8], 4
      %s93 = int_to_ptr.vmem [resolvable:$true] %s92
      %95 = dma.vmem_to_hbm [thread:$0]  %s93, 256, %s3, [#allocation4]
    $region29: #{tpu_custom_call.1} parent=1 // pred_fallthru
      _
    // Predicated region
    $region30: #{tpu_custom_call.1} parent=1 // pred_check
      _
    $region31: #{tpu_custom_call.1} parent=1 // pred_check_branch
      %97 = sbr.rel (0) target = $region33
    $region32: #{tpu_custom_call.1} parent=1 // pred_region
      %98 = dma.done [#allocation4], 256
    $region33: #{tpu_custom_call.1} parent=1 // pred_fallthru
      _
    %99 = vsyncpa [#allocation3], 1
    %100 = vsyncpa [#allocation6], 1
    %101 = vsyncpa [#allocation4], 1

</llo_original>
